<compile_context>
chip_gen: v7x
topology: tpu7x:2x2x1
jax: 0.10.0
libtpu: 0.0.40
codegen_flags: <defaults>
</compile_context>

<pallas_src>
import functools

import jax
import jax.numpy as jnp
from jax.experimental import pallas as pl
from jax.experimental.pallas import tpu as pltpu

LANES = 128          # vreg lane width
NEG_MASK = -1e30     # finite (not -inf) so shifted = logit - max never hits inf - inf


def _round_up(n, m):
    return ((n + m - 1) // m) * m


def classnet_kernel(x_ref, w1_ref, b1_ref, w2_ref, b2_ref, o_ref):
    # fc1: read the f32 x tile straight from HBM and cast to bf16 in-kernel (VPU)
    # so the MXU runs its bf16 path without an extra wrapper-side cast pass.
    x = x_ref[...].astype(jnp.bfloat16)
    h = jnp.dot(x, w1_ref[...], preferred_element_type=jnp.float32)
    h = jnp.maximum(h + b1_ref[...], 0.0)

    # PyTorch's x.view(-1, hidden_size) is a no-op here: h is already (tile_m, hidden).

    # fc2 over the lane-dense (hidden, 128) zero-padded weight slab.  Padded lanes
    # contribute 0 from the matmul and carry a -1e30 bias, so they self-mask in the
    # log_softmax (no iota/where needed).
    logits = jnp.dot(h.astype(jnp.bfloat16), w2_ref[...],
                     preferred_element_type=jnp.float32) + b2_ref[...]

    # Numerically-stable log_softmax over the lane axis (f32).
    m = jnp.max(logits, axis=-1, keepdims=True)
    shifted = logits - m
    lse = jnp.log(jnp.sum(jnp.exp(shifted), axis=-1, keepdims=True))
    o_ref[...] = (shifted - lse).astype(o_ref.dtype)   # bf16 writeback


def prepare_classnet_params(w1, b1, w2, b2):
    """One-time (init-time) weight preprocessing: bf16 cast + lane-dense padding.

    w1: (input_size, hidden) f32, b1: (1, hidden) f32
    w2: (hidden, out_dim) f32,    b2: (1, out_dim) f32
    Returns (w1_bf16, b1_f32, w2_padded_bf16, b2_padded_f32).
    """
    hidden, out_dim = w2.shape
    n_out = _round_up(out_dim, LANES)
    w2p = jnp.zeros((hidden, n_out), jnp.bfloat16).at[:, :out_dim].set(
        w2.astype(jnp.bfloat16))
    # Padded lanes get a large finite negative bias -> exp() underflows to 0.
    b2p = jnp.full((1, n_out), NEG_MASK, jnp.float32).at[:, :out_dim].set(
        b2.astype(jnp.float32))
    return w1.astype(jnp.bfloat16), b1.astype(jnp.float32), w2p, b2p


def _choose_tile_m(B, tile_m):
    # Keep >= 2 grid steps whenever possible so dimension_semantics=("parallel",)
    # can shard the batch across both TensorCores on v7x (no-op on v5e/v6e).
    tm = min(tile_m, _round_up(max(pl.cdiv(B, 2), 1), 8))
    return max(tm, 8)


def _vmem_budget_bytes(tm, in_dim, hidden, n_out):
    dbl = 2  # pipeline double-buffering of block-spec'd operands
    x_tiles = dbl * tm * in_dim * 4          # f32 x tile
    o_tiles = dbl * tm * n_out * 2           # bf16 output slab
    w1_res = dbl * in_dim * hidden * 2       # bf16 resident weights (counted x2, conservative)
    w2_res = dbl * hidden * n_out * 2
    b_res = dbl * (hidden + n_out) * 4
    interm = tm * hidden * (4 + 2) + 2 * tm * n_out * 4   # h f32 + h bf16 + logits
    return x_tiles + o_tiles + w1_res + w2_res + b_res + interm + (4 << 20)


@functools.partial(jax.jit, static_argnames=("out_dim", "tile_m"))
def classnet_forward(x, w1, b1, w2p, b2p, *, out_dim=2, tile_m=512):
    """log_softmax(relu(x @ w1 + b1) @ w2 + b2, axis=1) with pre-prepared params.

    x: (B, input_size) f32.  Returns (B, out_dim) f32 log-probabilities.
    """
    B, in_dim = x.shape
    hidden = w1.shape[1]
    n_out = w2p.shape[1]

    tm = _choose_tile_m(B, tile_m)
    grid = (pl.cdiv(B, tm),)     # edge block may run past B; its rows are sliced off

    vmem_limit = min(max(_vmem_budget_bytes(tm, in_dim, hidden, n_out),
                         32 * 1024 * 1024),
                     64 * 1024 * 1024)   # budget against v7x's 64 MiB VMEM

    out = pl.pallas_call(
        classnet_kernel,
        out_shape=jax.ShapeDtypeStruct((B, n_out), jnp.bfloat16),
        grid_spec=pltpu.PrefetchScalarGridSpec(
            num_scalar_prefetch=0,
            grid=grid,
            in_specs=[
                pl.BlockSpec((tm, in_dim), lambda i: (i, 0)),      # x batch tile (f32)
                pl.BlockSpec((in_dim, hidden), lambda i: (0, 0)),  # w1 bf16 (resident)
                pl.BlockSpec((1, hidden), lambda i: (0, 0)),       # b1 f32 (resident)
                pl.BlockSpec((hidden, n_out), lambda i: (0, 0)),   # w2 padded bf16 (resident)
                pl.BlockSpec((1, n_out), lambda i: (0, 0)),        # b2 padded f32 (resident)
            ],
            out_specs=pl.BlockSpec((tm, n_out), lambda i: (i, 0)),
        ),
        compiler_params=pltpu.CompilerParams(
            dimension_semantics=("parallel",),   # independent batch tiles
            vmem_limit_bytes=int(vmem_limit)),
    )(x, w1, b1, w2p, b2p)

    # Drop the 126 padded lanes (and any edge-block rows); tiny slice, cast back to f32.
    return out[:B, :out_dim].astype(jnp.float32)


def init_params(key, input_size, hidden_size, out_size=2):
    # Deterministic synthetic init; PyTorch stores Linear weight as (out, in),
    # transposed here to (in, out) for the kernel.
    k1, k2, k3, k4 = jax.random.split(key, 4)
    s1 = 1.0 / jnp.sqrt(input_size)
    s2 = 1.0 / jnp.sqrt(hidden_size)
    w1 = jax.random.uniform(k1, (hidden_size, input_size), jnp.float32, -s1, s1).T
    b1 = jax.random.uniform(k2, (1, hidden_size), jnp.float32, -s1, s1)
    w2 = jax.random.uniform(k3, (out_size, hidden_size), jnp.float32, -s2, s2).T
    b2 = jax.random.uniform(k4, (1, out_size), jnp.float32, -s2, s2)
    return w1, b1, w2, b2


if __name__ == "__main__":
    batch = 12           # deliberately NOT a multiple of the batch tile (edge block)
    input_size = 128
    hidden_size = 256

    key = jax.random.PRNGKey(0)
    kx, kp = jax.random.split(key)
    x = jax.random.normal(kx, (batch, input_size), jnp.float32)
    w1, b1, w2, b2 = init_params(kp, input_size, hidden_size)

    # One-time weight prep (bf16 cast + lane padding) hoisted out of the call path.
    w1b, b1f, w2p, b2p = prepare_classnet_params(w1, b1, w2, b2)

    out = classnet_forward(x, w1b, b1f, w2p, b2p, out_dim=2, tile_m=512)
    out = jax.block_until_ready(out)
    assert out.shape == (batch, 2)

    # Reference with the same bf16-matmul / f32-accumulate recipe as the kernel.
    h_ref = jnp.maximum(
        jnp.dot(x.astype(jnp.bfloat16), w1.astype(jnp.bfloat16),
                preferred_element_type=jnp.float32) + b1, 0.0)
    logits_ref = jnp.dot(h_ref.astype(jnp.bfloat16), w2.astype(jnp.bfloat16),
                         preferred_element_type=jnp.float32) + b2
    ref = jax.nn.log_softmax(logits_ref, axis=1)
    assert jnp.allclose(out, ref, atol=2e-2, rtol=2e-2), "mismatch vs bf16 reference"

    # Loose check against the exact f32 math of the PyTorch module.
    ref32 = jax.nn.log_softmax(jnp.maximum(x @ w1 + b1, 0.0) @ w2 + b2, axis=1)
    assert jnp.allclose(out, ref32, atol=5e-2, rtol=5e-2), "mismatch vs f32 reference"

    # log_softmax sanity: rows normalize to ~1 despite lane padding / bf16 output.
    assert jnp.allclose(jnp.sum(jnp.exp(out), axis=1), 1.0, atol=2e-2)

    print("KERNEL_OK")
</pallas_src>

<mosaic_0001>
module attributes {stable_mosaic.version = 11 : i64} {
  func.func @classnet_kernel(%arg0: i32, %arg1: memref<8x128xf32, #tpu.memory_space<vmem>>, %arg2: memref<128x256xbf16, #tpu.memory_space<vmem>>, %arg3: memref<1x256xf32, #tpu.memory_space<vmem>>, %arg4: memref<256x128xbf16, #tpu.memory_space<vmem>>, %arg5: memref<1x128xf32, #tpu.memory_space<vmem>>, %arg6: memref<8x128xbf16, #tpu.memory_space<vmem>>) attributes {dimension_semantics = [#tpu.dimension_semantics<parallel>], iteration_bounds = array<i64: 2>, scalar_prefetch = 0 : i64, scratch_operands = 0 : i64, tpu.core_type = #tpu.core_type<tc>, window_params = [{transform_indices = @transform_0, window_bounds = array<i64: 8, 128>}, {pipeline_mode = #tpu.pipeline_mode<synchronous>, transform_indices = @transform_1, window_bounds = array<i64: 128, 256>}, {pipeline_mode = #tpu.pipeline_mode<synchronous>, transform_indices = @transform_2, window_bounds = array<i64: 1, 256>}, {pipeline_mode = #tpu.pipeline_mode<synchronous>, transform_indices = @transform_3, window_bounds = array<i64: 256, 128>}, {pipeline_mode = #tpu.pipeline_mode<synchronous>, transform_indices = @transform_4, window_bounds = array<i64: 1, 128>}, {transform_indices = @transform_5, window_bounds = array<i64: 8, 128>}]} {
    %c0 = arith.constant 0 : index
    %c0_0 = arith.constant 0 : index
    %0 = vector.load %arg1[%c0, %c0_0] : memref<8x128xf32, #tpu.memory_space<vmem>>, vector<8x128xf32>
    %1 = arith.truncf %0 : vector<8x128xf32> to vector<8x128xbf16>
    %c0_1 = arith.constant 0 : index
    %c0_2 = arith.constant 0 : index
    %2 = vector.load %arg2[%c0_1, %c0_2] : memref<128x256xbf16, #tpu.memory_space<vmem>>, vector<128x256xbf16>
    %cst = arith.constant dense<0.000000e+00> : vector<8x256xf32>
    %3 = tpu.matmul %1, %2, %cst {dimension_numbers = #tpu.dot_dimension_numbers<[1], [0], [0], [1], [0, 0, 1, 1], [], []>} : vector<8x128xbf16>, vector<128x256xbf16>, vector<8x256xf32> -> vector<8x256xf32>
    %c0_3 = arith.constant 0 : index
    %c0_4 = arith.constant 0 : index
    %4 = vector.load %arg3[%c0_3, %c0_4] : memref<1x256xf32, #tpu.memory_space<vmem>>, vector<1x256xf32>
    %5 = vector.broadcast %4 : vector<1x256xf32> to vector<8x256xf32>
    %6 = arith.addf %3, %5 : vector<8x256xf32>
    %cst_5 = arith.constant 0.000000e+00 : f32
    %7 = vector.broadcast %cst_5 : f32 to vector<8x256xf32>
    %8 = arith.maximumf %6, %7 : vector<8x256xf32>
    %9 = arith.truncf %8 : vector<8x256xf32> to vector<8x256xbf16>
    %c0_6 = arith.constant 0 : index
    %c0_7 = arith.constant 0 : index
    %10 = vector.load %arg4[%c0_6, %c0_7] : memref<256x128xbf16, #tpu.memory_space<vmem>>, vector<256x128xbf16>
    %cst_8 = arith.constant dense<0.000000e+00> : vector<8x128xf32>
    %11 = tpu.matmul %9, %10, %cst_8 {dimension_numbers = #tpu.dot_dimension_numbers<[1], [0], [0], [1], [0, 0, 1, 1], [], []>} : vector<8x256xbf16>, vector<256x128xbf16>, vector<8x128xf32> -> vector<8x128xf32>
    %c0_9 = arith.constant 0 : index
    %c0_10 = arith.constant 0 : index
    %12 = vector.load %arg5[%c0_9, %c0_10] : memref<1x128xf32, #tpu.memory_space<vmem>>, vector<1x128xf32>
    %13 = vector.broadcast %12 : vector<1x128xf32> to vector<8x128xf32>
    %14 = arith.addf %11, %13 : vector<8x128xf32>
    %cst_11 = arith.constant dense<0xFF800000> : vector<8xf32>
    %15 = vector.multi_reduction <maximumf>, %14, %cst_11 [1] : vector<8x128xf32> to vector<8xf32>
    %16 = vector.shape_cast %15 : vector<8xf32> to vector<8x1xf32>
    %17 = vector.broadcast %16 : vector<8x1xf32> to vector<8x128xf32>
    %18 = arith.subf %14, %17 : vector<8x128xf32>
    %19 = math.exp %18 : vector<8x128xf32>
    %cst_12 = arith.constant dense<0.000000e+00> : vector<8xf32>
    %20 = vector.multi_reduction <add>, %19, %cst_12 [1] : vector<8x128xf32> to vector<8xf32>
    %21 = vector.shape_cast %20 : vector<8xf32> to vector<8x1xf32>
    %22 = math.log %21 : vector<8x1xf32>
    %23 = vector.broadcast %22 : vector<8x1xf32> to vector<8x128xf32>
    %24 = arith.subf %18, %23 : vector<8x128xf32>
    %25 = arith.truncf %24 : vector<8x128xf32> to vector<8x128xbf16>
    %c0_13 = arith.constant 0 : index
    %c0_14 = arith.constant 0 : index
    %26 = vector.load %arg6[%c0_13, %c0_14] : memref<8x128xbf16, #tpu.memory_space<vmem>>, vector<8x128xbf16>
    tpu.vector_store %arg6[%c0_13, %c0_14], %25 {strides = array<i32>} : memref<8x128xbf16, #tpu.memory_space<vmem>>, vector<8x128xbf16>,
    return
  }
  func.func @transform_0(%arg0: i32) -> (i32, i32) {
    %c0_i32 = arith.constant 0 : i32
    %c0_i32_0 = arith.constant 0 : i32
    return %arg0, %c0_i32 : i32, i32
  }
  func.func @transform_1(%arg0: i32) -> (i32, i32) {
    %c0_i32 = arith.constant 0 : i32
    %c0_i32_0 = arith.constant 0 : i32
    %c0_i32_1 = arith.constant 0 : i32
    return %c0_i32, %c0_i32_0 : i32, i32
  }
  func.func @transform_2(%arg0: i32) -> (i32, i32) {
    %c0_i32 = arith.constant 0 : i32
    %c0_i32_0 = arith.constant 0 : i32
    %c0_i32_1 = arith.constant 0 : i32
    return %c0_i32, %c0_i32_0 : i32, i32
  }
  func.func @transform_3(%arg0: i32) -> (i32, i32) {
    %c0_i32 = arith.constant 0 : i32
    %c0_i32_0 = arith.constant 0 : i32
    %c0_i32_1 = arith.constant 0 : i32
    return %c0_i32, %c0_i32_0 : i32, i32
  }
  func.func @transform_4(%arg0: i32) -> (i32, i32) {
    %c0_i32 = arith.constant 0 : i32
    %c0_i32_0 = arith.constant 0 : i32
    %c0_i32_1 = arith.constant 0 : i32
    return %c0_i32, %c0_i32_0 : i32, i32
  }
  func.func @transform_5(%arg0: i32) -> (i32, i32) {
    %c0_i32 = arith.constant 0 : i32
    %c0_i32_0 = arith.constant 0 : i32
    return %arg0, %c0_i32 : i32, i32
  }
}

</mosaic_0001>

<llo_original>
// kernel: classnet_forward.1
$region0: #{classnet_forward.1}
  #allocation0 [shape = 'u32[]', space=smem, size = 0x4, offset = 0x4, fixed_abs, tag = 'smem constant byte address 0x4 - core index']
  #allocation1 [shape = 'u32[144,128]{1,0:T(1,128)}', space=vmem, size = 0x12000, scoped, tag = 'internal scratch']
  %s0 = inlined_call_operand.hbm [shape: f32[12,128], index: 0, kind: input, shape index: {}]
  %s1 = inlined_call_operand.hbm [shape: bf16[128,256], index: 1, kind: input, shape index: {}]
  %s2 = inlined_call_operand.vmem [shape: f32[1,256], index: 2, kind: input, shape index: {}]
  %s3 = inlined_call_operand.hbm [shape: bf16[256,128], index: 3, kind: input, shape index: {}]
  %s4 = inlined_call_operand.vmem [shape: f32[1,128], index: 4, kind: input, shape index: {}]
  %s5 = inlined_call_operand.vmem [shape: bf16[12,128], index: 5, kind: output, shape index: {}]
  %s6 = sld [smem:[#allocation0]]
  $region65: #{classnet_forward.1} parent=0
    _
  %s8 = ssub.s32 1, %s6
  %s9 = scalar_select 0, %s8, %s6
  $region1: #{classnet_forward.1} parent=0
    #allocation2 [shape = 'u8[8192]{0}', space=vmem, size = 0x2000, scoped, tag = 'input window, operand 0']
    #allocation3 [shape = 's32[2]{0}', space=sflag, size = 0x8, scoped, tag = 'scoped memory for classnet_forward.1']
    #allocation4 [shape = 'u8[65536]{0}', space=vmem, size = 0x10000, scoped, tag = 'input window, operand 1, single buffered']
    #allocation5 [shape = 's32[1]{0}', space=sflag, size = 0x4, scoped, tag = 'scoped memory for classnet_forward.1']
    #allocation6 [shape = 'u8[65536]{0}', space=vmem, size = 0x10000, scoped, tag = 'input window, operand 3, single buffered']
    %10 = vsyncpa [#allocation3], 0
    %s11 = scalar_lea.sflag [#allocation3], 1
    %12 = vsyncpa %s11, 0
    %13 = vsyncpa [#allocation5], 0
    loop: start=0, step=1, limit=4
    $region2: #{classnet_forward.1} parent=1 // loop_pre_header
      _
    $region3: #{classnet_forward.1} parent=1 // loop_header
      %s15 = sphi 0, %s19
      %p16 = scmp.ge.s32.totalorder %s15, 4
      %s25 = sphi 0, %s27
      %s28 = sphi 0, %s25
      %s29 = sphi 0, %s28
      %s45 = sphi 0, %s29
      %s49 = sphi 0, %s49
      %s51 = sphi 0, %s49
      %s52 = sphi 0, %s51
      %s66 = sphi 0, %s52
      %s70 = sphi 0, %s70
      %s72 = sphi 0, %s70
      %s73 = sphi 0, %s72
      %s87 = sphi 0, %s73
      %s91 = sphi 0, %s91
      %s93 = sphi 0, %s91
      %s94 = sphi 0, %s93
      %s108 = sphi 0, %s94
      %s112 = sphi 0, %s112
      %s114 = sphi 0, %s112
      %s115 = sphi 0, %s114
      %s129 = sphi 0, %s115
      %s135 = sphi 0, %s137
      %s138 = sphi 0, %s135
      %s139 = sphi 0, %s138
      %s155 = sphi 0, %s139
    $region4: #{classnet_forward.1} parent=1 // loop_header_branch
      %18 = sbr.rel (%p16) target = $region8
    $region5: #{classnet_forward.1} parent=1 // loop_body
      %s20 = ssub.s32 %s15, 1
      %s21 = ssub.s32 %s15, 2
      %s22 = sadd.s32 %s15, 1
      %s23 = ssub.s32 %s15, %s22
      %p24 = scmp.eq.s32.totalorder %s23, 0
      %s26 = sadd.s32 %s25, 1
      %s27 = scalar_select %p24, %s25, %s26
      %p30 = pneg %p24
      %p31 = scmp.eq.s32.totalorder %s15, 1
      %p32 = por %p30, %p31
      %p33 = scmp.ne.s32.totalorder %s25, %s28
      %p34 = scmp.eq.s32.totalorder %s15, 0
      %p35 = por %p33, %p34
      %p36 = scmp.ne.s32.totalorder %s25, %s28
      %p37 = scmp.eq.s32.totalorder %s20, 1
      %p38 = por %p36, %p37
      %p39 = scmp.ne.s32.totalorder %s28, %s29
      %p40 = scmp.eq.s32.totalorder %s20, 0
      %p41 = por %p39, %p40
      %p42 = scmp.ne.s32.totalorder %s28, %s29
      %p43 = scmp.eq.s32.totalorder %s21, 1
      %p44 = por %p42, %p43
      %p46 = scmp.ne.s32.totalorder %s29, %s45
      %p47 = scmp.eq.s32.totalorder %s21, 0
      %p48 = por %p46, %p47
      %s50 = sadd.s32 %s49, 1
      %p53 = scmp.eq.s32.totalorder %s15, 1
      %p54 = scmp.ne.s32.totalorder %s49, %s51
      %p55 = scmp.eq.s32.totalorder %s15, 0
      %p56 = por %p54, %p55
      %p57 = scmp.ne.s32.totalorder %s49, %s51
      %p58 = scmp.eq.s32.totalorder %s20, 1
      %p59 = por %p57, %p58
      %p60 = scmp.ne.s32.totalorder %s51, %s52
      %p61 = scmp.eq.s32.totalorder %s20, 0
      %p62 = por %p60, %p61
      %p63 = scmp.ne.s32.totalorder %s51, %s52
      %p64 = scmp.eq.s32.totalorder %s21, 1
      %p65 = por %p63, %p64
      %p67 = scmp.ne.s32.totalorder %s52, %s66
      %p68 = scmp.eq.s32.totalorder %s21, 0
      %p69 = por %p67, %p68
      %s71 = sadd.s32 %s70, 1
      %p74 = scmp.eq.s32.totalorder %s15, 1
      %p75 = scmp.ne.s32.totalorder %s70, %s72
      %p76 = scmp.eq.s32.totalorder %s15, 0
      %p77 = por %p75, %p76
      %p78 = scmp.ne.s32.totalorder %s70, %s72
      %p79 = scmp.eq.s32.totalorder %s20, 1
      %p80 = por %p78, %p79
      %p81 = scmp.ne.s32.totalorder %s72, %s73
      %p82 = scmp.eq.s32.totalorder %s20, 0
      %p83 = por %p81, %p82
      %p84 = scmp.ne.s32.totalorder %s72, %s73
      %p85 = scmp.eq.s32.totalorder %s21, 1
      %p86 = por %p84, %p85
      %p88 = scmp.ne.s32.totalorder %s73, %s87
      %p89 = scmp.eq.s32.totalorder %s21, 0
      %p90 = por %p88, %p89
      %s92 = sadd.s32 %s91, 1
      %p95 = scmp.eq.s32.totalorder %s15, 1
      %p96 = scmp.ne.s32.totalorder %s91, %s93
      %p97 = scmp.eq.s32.totalorder %s15, 0
      %p98 = por %p96, %p97
      %p99 = scmp.ne.s32.totalorder %s91, %s93
      %p100 = scmp.eq.s32.totalorder %s20, 1
      %p101 = por %p99, %p100
      %p102 = scmp.ne.s32.totalorder %s93, %s94
      %p103 = scmp.eq.s32.totalorder %s20, 0
      %p104 = por %p102, %p103
      %p105 = scmp.ne.s32.totalorder %s93, %s94
      %p106 = scmp.eq.s32.totalorder %s21, 1
      %p107 = por %p105, %p106
      %p109 = scmp.ne.s32.totalorder %s94, %s108
      %p110 = scmp.eq.s32.totalorder %s21, 0
      %p111 = por %p109, %p110
      %s113 = sadd.s32 %s112, 1
      %p116 = scmp.eq.s32.totalorder %s15, 1
      %p117 = scmp.ne.s32.totalorder %s112, %s114
      %p118 = scmp.eq.s32.totalorder %s15, 0
      %p119 = por %p117, %p118
      %p120 = scmp.ne.s32.totalorder %s112, %s114
      %p121 = scmp.eq.s32.totalorder %s20, 1
      %p122 = por %p120, %p121
      %p123 = scmp.ne.s32.totalorder %s114, %s115
      %p124 = scmp.eq.s32.totalorder %s20, 0
      %p125 = por %p123, %p124
      %p126 = scmp.ne.s32.totalorder %s114, %s115
      %p127 = scmp.eq.s32.totalorder %s21, 1
      %p128 = por %p126, %p127
      %p130 = scmp.ne.s32.totalorder %s115, %s129
      %p131 = scmp.eq.s32.totalorder %s21, 0
      %p132 = por %p130, %p131
      %s133 = ssub.s32 %s15, %s22
      %p134 = scmp.eq.s32.totalorder %s133, 0
      %s136 = sadd.s32 %s135, 1
      %s137 = scalar_select %p134, %s135, %s136
      %p140 = pneg %p134
      %p141 = scmp.eq.s32.totalorder %s15, 1
      %p142 = por %p140, %p141
      %p143 = scmp.ne.s32.totalorder %s135, %s138
      %p144 = scmp.eq.s32.totalorder %s15, 0
      %p145 = por %p143, %p144
      %p146 = scmp.ne.s32.totalorder %s135, %s138
      %p147 = scmp.eq.s32.totalorder %s20, 1
      %p148 = por %p146, %p147
      %p149 = scmp.ne.s32.totalorder %s138, %s139
      %p150 = scmp.eq.s32.totalorder %s20, 0
      %p151 = por %p149, %p150
      %p152 = scmp.ne.s32.totalorder %s138, %s139
      %p153 = scmp.eq.s32.totalorder %s21, 1
      %p154 = por %p152, %p153
      %p156 = scmp.ne.s32.totalorder %s139, %s155
      %p157 = scmp.eq.s32.totalorder %s21, 0
      %p158 = por %p156, %p157
      %p159 = scmp.le.s32.totalorder 1, %s15
      %p160 = scmp.lt.s32.totalorder %s15, 3
      %p161 = pnand %p159, %p160
      %p162 = pneg %p161
      // Predicated region
      $region9: #{classnet_forward.1} parent=5 // pred_check
        _
      $region10: #{classnet_forward.1} parent=5 // pred_check_branch
        %164 = sbr.rel (%p161) target = $region12
      $region11: #{classnet_forward.1} parent=5 // pred_region
        %s165 = ssub.s32 %s15, 1
        // Predicated region
        $region13: #{classnet_forward.1} parent=11 // pred_check
          %p166 = pneg %p62
        $region14: #{classnet_forward.1} parent=11 // pred_check_branch
          %168 = sbr.rel (%p166) target = $region16
        $region15: #{classnet_forward.1} parent=11 // pred_region
          %s170 = ssub.s32 2048, 2048
          %171 = vsyncadd [#allocation5], %s170
          %s172 = sshll.u32 [#allocation4], 4
          %s173 = int_to_ptr.vmem [resolvable:$true] %s172
          %178 = dma.hbm_to_vmem [thread:$0]  %s1, 2048, %s173, [#allocation5], 128, 128, 8
        $region16: #{classnet_forward.1} parent=11 // pred_fallthru
          _
        // Predicated region
        $region17: #{classnet_forward.1} parent=11 // pred_check
          %p179 = pneg %p83
        $region18: #{classnet_forward.1} parent=11 // pred_check_branch
          %181 = sbr.rel (%p179) target = $region20
        $region19: #{classnet_forward.1} parent=11 // pred_region
          _
        $region20: #{classnet_forward.1} parent=11 // pred_fallthru
          _
        // Predicated region
        $region21: #{classnet_forward.1} parent=11 // pred_check
          %p182 = pneg %p104
        $region22: #{classnet_forward.1} parent=11 // pred_check_branch
          %184 = sbr.rel (%p182) target = $region24
        $region23: #{classnet_forward.1} parent=11 // pred_region
          %s186 = ssub.s32 2048, 2048
          %187 = vsyncadd [#allocation5], %s186
          %s188 = sshll.u32 [#allocation6], 4
          %s189 = int_to_ptr.vmem [resolvable:$true] %s188
          %194 = dma.hbm_to_vmem [thread:$0]  %s3, 2048, %s189, [#allocation5], 64, 64, 4
        $region24: #{classnet_forward.1} parent=11 // pred_fallthru
          _
        // Predicated region
        $region25: #{classnet_forward.1} parent=11 // pred_check
          %p195 = pneg %p125
        $region26: #{classnet_forward.1} parent=11 // pred_check_branch
          %197 = sbr.rel (%p195) target = $region28
        $region27: #{classnet_forward.1} parent=11 // pred_region
          _
        $region28: #{classnet_forward.1} parent=11 // pred_fallthru
          _
      $region12: #{classnet_forward.1} parent=5 // pred_fallthru
        _
      %p198 = scmp.lt.s32.totalorder %s15, 2
      // Predicated region
      $region29: #{classnet_forward.1} parent=5 // pred_check
        %p199 = pneg %p198
      $region30: #{classnet_forward.1} parent=5 // pred_check_branch
        %201 = sbr.rel (%p199) target = $region32
      $region31: #{classnet_forward.1} parent=5 // pred_region
        // Predicated region
        $region33: #{classnet_forward.1} parent=31 // pred_check
          %p202 = pneg %p35
        $region34: #{classnet_forward.1} parent=31 // pred_check_branch
          %204 = sbr.rel (%p202) target = $region36
        $region35: #{classnet_forward.1} parent=31 // pred_region
          %s205 = sand.u32 %s25, 1
          %s206 = scalar_lea.sflag [#allocation3], %s205
          %s207 = sand.u32 %s25, 1
          %s208 = smul.addr %s207, 8
          %s209 = scalar_lea.vmem [#allocation2], %s208
          %s211 = ssub.s32 128, 128
          %212 = vsyncadd %s206, %s211
          %s213 = smul.addr %s15, 128
          %s214 = scalar_lea.hbm %s0, %s213
          %s216 = sshll.u32 %s209, 4
          %s217 = int_to_ptr.vmem [resolvable:$true] %s216
          %219 = dma.hbm_to_vmem [thread:$0]  %s214, 128, %s217, %s206
        $region36: #{classnet_forward.1} parent=31 // pred_fallthru
          _
      $region32: #{classnet_forward.1} parent=5 // pred_fallthru
        _
      %p220 = scmp.le.s32.totalorder 1, %s15
      %p221 = scmp.lt.s32.totalorder %s15, 3
      %p222 = pnand %p220, %p221
      %p223 = pneg %p222
      // Predicated region
      $region37: #{classnet_forward.1} parent=5 // pred_check
        _
      $region38: #{classnet_forward.1} parent=5 // pred_check_branch
        %225 = sbr.rel (%p222) target = $region40
      $region39: #{classnet_forward.1} parent=5 // pred_region
        %s226 = ssub.s32 %s15, 1
        %s227 = sand.u32 %s28, 1
        %s228 = scalar_lea.sflag [#allocation3], %s227
        %s229 = sand.u32 %s28, 1
        %s230 = smul.addr %s229, 8
        %s231 = scalar_lea.vmem [#allocation2], %s230
        // Predicated region
        $region41: #{classnet_forward.1} parent=39 // pred_check
          %p232 = pneg %p41
        $region42: #{classnet_forward.1} parent=39 // pred_check_branch
          %234 = sbr.rel (%p232) target = $region44
        $region43: #{classnet_forward.1} parent=39 // pred_region
          %235 = dma.done %s228, 128
        $region44: #{classnet_forward.1} parent=39 // pred_fallthru
          _
        // Predicated region
        $region45: #{classnet_forward.1} parent=39 // pred_check
          %p236 = pneg %p62
        $region46: #{classnet_forward.1} parent=39 // pred_check_branch
          %238 = sbr.rel (%p236) target = $region48
        $region47: #{classnet_forward.1} parent=39 // pred_region
          %239 = dma.done [#allocation5], 2048
        $region48: #{classnet_forward.1} parent=39 // pred_fallthru
          _
        // Predicated region
        $region49: #{classnet_forward.1} parent=39 // pred_check
          %p240 = pneg %p104
        $region50: #{classnet_forward.1} parent=39 // pred_check_branch
          %242 = sbr.rel (%p240) target = $region52
        $region51: #{classnet_forward.1} parent=39 // pred_region
          %243 = dma.done [#allocation5], 2048
        $region52: #{classnet_forward.1} parent=39 // pred_fallthru
          _
        %s244 = sand.u32 %s28, 1
        %s245 = scalar_lea.sflag [#allocation3], %s244
        %s246 = sand.u32 %s28, 1
        %s247 = smul.addr %s246, 8
        %s248 = scalar_lea.vmem [#allocation2], %s247
        %p249 = pneg %p41
        %p250 = pneg %p38
        %p251 = pneg %p62
        %p252 = pneg %p59
        %p253 = pneg %p83
        %p254 = pneg %p80
        %p255 = pneg %p104
        %p256 = pneg %p101
        %p257 = pneg %p125
        %p258 = pneg %p122
        %p259 = pneg %p151
        %p260 = pneg %p148
        %p261 = scmp.lt.s32.totalorder %s20, 1
        %s262 = scalar_select %p261, %s20, 1
        %s263 = smul.addr %s262, 4
        %s264 = scalar_lea.vmem %s5, %s263
        %p265 = scmp.lt.s32.totalorder %s20, 1
        %s266 = scalar_select %p265, %s20, 1
        %s267 = smul.addr %s266, 4
        %s268 = scalar_lea.vmem %s5, %s267
        %v270 = vld [vmem:[%s231] sm:$0xff]
        %v271 = vpack.c.bf16 %v270, %v270
        %v272 = vld [vmem:[#allocation4] sm:$0xff]
        %v273 = vld [vmem:[#allocation4 + $0x8] sm:$0xff]
        %v274 = vld [vmem:[#allocation4 + $0x10] sm:$0xff]
        %v275 = vld [vmem:[#allocation4 + $0x18] sm:$0xff]
        %v276 = vld [vmem:[#allocation4 + $0x20] sm:$0xff]
        %v277 = vld [vmem:[#allocation4 + $0x28] sm:$0xff]
        %v278 = vld [vmem:[#allocation4 + $0x30] sm:$0xff]
        %v279 = vld [vmem:[#allocation4 + $0x38] sm:$0xff]
        %v280 = vld [vmem:[#allocation4 + $0x40] sm:$0xff]
        %v281 = vld [vmem:[#allocation4 + $0x48] sm:$0xff]
        %v282 = vld [vmem:[#allocation4 + $0x50] sm:$0xff]
        %v283 = vld [vmem:[#allocation4 + $0x58] sm:$0xff]
        %v284 = vld [vmem:[#allocation4 + $0x60] sm:$0xff]
        %v285 = vld [vmem:[#allocation4 + $0x68] sm:$0xff]
        %v286 = vld [vmem:[#allocation4 + $0x70] sm:$0xff]
        %v287 = vld [vmem:[#allocation4 + $0x78] sm:$0xff]
        %v288 = vld [vmem:[%s2] sm:$0x3]
        %v290 = vlaneseq
        %v291 = vshrl.u32 %v290, 7
        %v292 = vsub.s32 0, %v291
        %v293 = vrot.slane %v288, %v292
        %v294 = vlaneseq
        %v295 = vshrl.u32 %v294, 7
        %v296 = vsub.s32 1, %v295
        %v297 = vrot.slane %v288, %v296
        %v316 = vunpack.c.l.b16 %v272
        %v317 = vunpack.c.h.b16 %v272
        %v318 = vunpack.c.l.b16 %v273
        %v319 = vunpack.c.h.b16 %v273
        %v320 = vunpack.c.l.b16 %v274
        %v321 = vunpack.c.h.b16 %v274
        %v322 = vunpack.c.l.b16 %v275
        %v323 = vunpack.c.h.b16 %v275
        %v324 = vunpack.c.l.b16 %v276
        %v325 = vunpack.c.h.b16 %v276
        %v326 = vunpack.c.l.b16 %v277
        %v327 = vunpack.c.h.b16 %v277
        %v328 = vunpack.c.l.b16 %v278
        %v329 = vunpack.c.h.b16 %v278
        %v330 = vunpack.c.l.b16 %v279
        %v331 = vunpack.c.h.b16 %v279
        %v332 = vunpack.c.l.b16 %v280
        %v333 = vunpack.c.h.b16 %v280
        %v334 = vunpack.c.l.b16 %v281
        %v335 = vunpack.c.h.b16 %v281
        %v336 = vunpack.c.l.b16 %v282
        %v337 = vunpack.c.h.b16 %v282
        %v338 = vunpack.c.l.b16 %v283
        %v339 = vunpack.c.h.b16 %v283
        %v340 = vunpack.c.l.b16 %v284
        %v341 = vunpack.c.h.b16 %v284
        %v342 = vunpack.c.l.b16 %v285
        %v343 = vunpack.c.h.b16 %v285
        %v344 = vunpack.c.l.b16 %v286
        %v345 = vunpack.c.h.b16 %v286
        %v346 = vunpack.c.l.b16 %v287
        %v347 = vunpack.c.h.b16 %v287
        %v348 = vpack.c.b16 %v318, %v316
        %v349 = vpack.c.b16 %v319, %v317
        %v350 = vpack.c.b16 %v322, %v320
        %v351 = vpack.c.b16 %v323, %v321
        %v352 = vpack.c.b16 %v326, %v324
        %v353 = vpack.c.b16 %v327, %v325
        %v354 = vpack.c.b16 %v330, %v328
        %v355 = vpack.c.b16 %v331, %v329
        %v356 = vpack.c.b16 %v334, %v332
        %v357 = vpack.c.b16 %v335, %v333
        %v358 = vpack.c.b16 %v338, %v336
        %v359 = vpack.c.b16 %v339, %v337
        %v360 = vpack.c.b16 %v342, %v340
        %v361 = vpack.c.b16 %v343, %v341
        %v362 = vpack.c.b16 %v346, %v344
        %v363 = vpack.c.b16 %v347, %v345
        %380 = vmatprep.subr.bf16.mxu0 %v349
        %381 = vmatpush1.bf16.msra.mxu0 %v348
        %382 = vmatprep.subr.bf16.mxu0 %v351
        %383 = vmatpush1.bf16.msra.mxu0 %v350
        %384 = vmatprep.subr.bf16.mxu0 %v353
        %385 = vmatpush1.bf16.msra.mxu0 %v352
        %386 = vmatprep.subr.bf16.mxu0 %v355
        %387 = vmatpush1.bf16.msra.mxu0 %v354
        %388 = vmatprep.subr.bf16.mxu0 %v357
        %389 = vmatpush1.bf16.msra.mxu0 %v356
        %390 = vmatprep.subr.bf16.mxu0 %v359
        %391 = vmatpush1.bf16.msra.mxu0 %v358
        %392 = vmatprep.subr.bf16.mxu0 %v361
        %393 = vmatpush1.bf16.msra.mxu0 %v360
        %394 = vmatprep.subr.bf16.mxu0 %v363
        %395 = vmatpush1.bf16.msra.mxu0 %v362
        %396 = vmatprep.subr.bf16.mxu0 0
        %397 = vmatpush1.bf16.msra.mxu0 0
        %398 = vmatprep.subr.bf16.mxu0 0
        %399 = vmatpush1.bf16.msra.mxu0 0
        %400 = vmatprep.subr.bf16.mxu0 0
        %401 = vmatpush1.bf16.msra.mxu0 0
        %402 = vmatprep.subr.bf16.mxu0 0
        %403 = vmatpush1.bf16.msra.mxu0 0
        %404 = vmatprep.subr.bf16.mxu0 0
        %405 = vmatpush1.bf16.msra.mxu0 0
        %406 = vmatprep.subr.bf16.mxu0 0
        %407 = vmatpush1.bf16.msra.mxu0 0
        %408 = vmatprep.subr.bf16.mxu0 0
        %409 = vmatpush1.bf16.msra.mxu0 0
        %410 = vmatprep.subr.bf16.mxu0 0
        %411 = vmatpush1.bf16.msra.mxu0 0
        %412 = vmatprep.mubr.bf16.mxu0 0
        %413 = vmatmul.mubr.bf16.gmra.mrb[0].mxu0 %v271
        %v414 = vpop.f32.mrb[0].mxu0
        %v415 = vadd.f32 %v293, %v414
        %v416 = vpop.f32.mrb[0].mxu0
        %v417 = vadd.f32 %v297, %v416
        %v418 = vpop.f32.mrb[0].mxu0
        %v419 = vpop.f32.mrb[0].mxu0
        %420 = vdwg.mxu0
        %v421 = vmax.f32 %v415, 0.0
        %v422 = vmax.f32 %v417, 0.0
        %v423 = vpack.c.bf16 %v421, %v421
        %v424 = vpack.c.bf16 %v422, %v422
        %v425 = vld [vmem:[#allocation6] sm:$0xf]
        %v426 = vld [vmem:[#allocation6 + $0x4] sm:$0xf]
        %v427 = vld [vmem:[#allocation6 + $0x8] sm:$0xf]
        %v428 = vld [vmem:[#allocation6 + $0xc] sm:$0xf]
        %v429 = vld [vmem:[#allocation6 + $0x10] sm:$0xf]
        %v430 = vld [vmem:[#allocation6 + $0x14] sm:$0xf]
        %v431 = vld [vmem:[#allocation6 + $0x18] sm:$0xf]
        %v432 = vld [vmem:[#allocation6 + $0x1c] sm:$0xf]
        %v433 = vld [vmem:[#allocation6 + $0x20] sm:$0xf]
        %v434 = vld [vmem:[#allocation6 + $0x24] sm:$0xf]
        %v435 = vld [vmem:[#allocation6 + $0x28] sm:$0xf]
        %v436 = vld [vmem:[#allocation6 + $0x2c] sm:$0xf]
        %v437 = vld [vmem:[#allocation6 + $0x30] sm:$0xf]
        %v438 = vld [vmem:[#allocation6 + $0x34] sm:$0xf]
        %v439 = vld [vmem:[#allocation6 + $0x38] sm:$0xf]
        %v440 = vld [vmem:[#allocation6 + $0x3c] sm:$0xf]
        %v441 = vld [vmem:[#allocation6 + $0x40] sm:$0xf]
        %v442 = vld [vmem:[#allocation6 + $0x44] sm:$0xf]
        %v443 = vld [vmem:[#allocation6 + $0x48] sm:$0xf]
        %v444 = vld [vmem:[#allocation6 + $0x4c] sm:$0xf]
        %v445 = vld [vmem:[#allocation6 + $0x50] sm:$0xf]
        %v446 = vld [vmem:[#allocation6 + $0x54] sm:$0xf]
        %v447 = vld [vmem:[#allocation6 + $0x58] sm:$0xf]
        %v448 = vld [vmem:[#allocation6 + $0x5c] sm:$0xf]
        %v449 = vld [vmem:[#allocation6 + $0x60] sm:$0xf]
        %v450 = vld [vmem:[#allocation6 + $0x64] sm:$0xf]
        %v451 = vld [vmem:[#allocation6 + $0x68] sm:$0xf]
        %v452 = vld [vmem:[#allocation6 + $0x6c] sm:$0xf]
        %v453 = vld [vmem:[#allocation6 + $0x70] sm:$0xf]
        %v454 = vld [vmem:[#allocation6 + $0x74] sm:$0xf]
        %v455 = vld [vmem:[#allocation6 + $0x78] sm:$0xf]
        %v456 = vld [vmem:[#allocation6 + $0x7c] sm:$0xf]
        %v457 = vld [vmem:[%s4] sm:$0x1]
        %v459 = vlaneseq
        %v460 = vshrl.u32 %v459, 7
        %v461 = vsub.s32 0, %v460
        %v462 = vrot.slane %v457, %v461
        %v496 = vunpack.c.l.b16 %v425
        %v497 = vunpack.c.l.b16 %v426
        %v498 = vunpack.c.l.b16 %v427
        %v499 = vunpack.c.l.b16 %v428
        %v500 = vunpack.c.l.b16 %v429
        %v501 = vunpack.c.l.b16 %v430
        %v502 = vunpack.c.l.b16 %v431
        %v503 = vunpack.c.l.b16 %v432
        %v504 = vunpack.c.l.b16 %v433
        %v505 = vunpack.c.l.b16 %v434
        %v506 = vunpack.c.l.b16 %v435
        %v507 = vunpack.c.l.b16 %v436
        %v508 = vunpack.c.l.b16 %v437
        %v509 = vunpack.c.l.b16 %v438
        %v510 = vunpack.c.l.b16 %v439
        %v511 = vunpack.c.l.b16 %v440
        %v512 = vunpack.c.l.b16 %v441
        %v513 = vunpack.c.l.b16 %v442
        %v514 = vunpack.c.l.b16 %v443
        %v515 = vunpack.c.l.b16 %v444
        %v516 = vunpack.c.l.b16 %v445
        %v517 = vunpack.c.l.b16 %v446
        %v518 = vunpack.c.l.b16 %v447
        %v519 = vunpack.c.l.b16 %v448
        %v520 = vunpack.c.l.b16 %v449
        %v521 = vunpack.c.l.b16 %v450
        %v522 = vunpack.c.l.b16 %v451
        %v523 = vunpack.c.l.b16 %v452
        %v524 = vunpack.c.l.b16 %v453
        %v525 = vunpack.c.l.b16 %v454
        %v526 = vunpack.c.l.b16 %v455
        %v527 = vunpack.c.l.b16 %v456
        %v528 = vpack.c.b16 %v497, %v496
        %v529 = vpack.c.b16 %v499, %v498
        %v530 = vpack.c.b16 %v501, %v500
        %v531 = vpack.c.b16 %v503, %v502
        %v532 = vpack.c.b16 %v505, %v504
        %v533 = vpack.c.b16 %v507, %v506
        %v534 = vpack.c.b16 %v509, %v508
        %v535 = vpack.c.b16 %v511, %v510
        %v536 = vpack.c.b16 %v513, %v512
        %v537 = vpack.c.b16 %v515, %v514
        %v538 = vpack.c.b16 %v517, %v516
        %v539 = vpack.c.b16 %v519, %v518
        %v540 = vpack.c.b16 %v521, %v520
        %v541 = vpack.c.b16 %v523, %v522
        %v542 = vpack.c.b16 %v525, %v524
        %v543 = vpack.c.b16 %v527, %v526
        %560 = vmatprep.subr.bf16.mxu0 0
        %561 = vmatpush1.bf16.msra.mxu0 %v528
        %562 = vmatprep.subr.bf16.mxu0 0
        %563 = vmatpush1.bf16.msra.mxu0 %v529
        %564 = vmatprep.subr.bf16.mxu0 0
        %565 = vmatpush1.bf16.msra.mxu0 %v530
        %566 = vmatprep.subr.bf16.mxu0 0
        %567 = vmatpush1.bf16.msra.mxu0 %v531
        %568 = vmatprep.subr.bf16.mxu0 0
        %569 = vmatpush1.bf16.msra.mxu0 %v532
        %570 = vmatprep.subr.bf16.mxu0 0
        %571 = vmatpush1.bf16.msra.mxu0 %v533
        %572 = vmatprep.subr.bf16.mxu0 0
        %573 = vmatpush1.bf16.msra.mxu0 %v534
        %574 = vmatprep.subr.bf16.mxu0 0
        %575 = vmatpush1.bf16.msra.mxu0 %v535
        %576 = vmatprep.subr.bf16.mxu0 0
        %577 = vmatpush1.bf16.msra.mxu0 %v536
        %578 = vmatprep.subr.bf16.mxu0 0
        %579 = vmatpush1.bf16.msra.mxu0 %v537
        %580 = vmatprep.subr.bf16.mxu0 0
        %581 = vmatpush1.bf16.msra.mxu0 %v538
        %582 = vmatprep.subr.bf16.mxu0 0
        %583 = vmatpush1.bf16.msra.mxu0 %v539
        %584 = vmatprep.subr.bf16.mxu0 0
        %585 = vmatpush1.bf16.msra.mxu0 %v540
        %586 = vmatprep.subr.bf16.mxu0 0
        %587 = vmatpush1.bf16.msra.mxu0 %v541
        %588 = vmatprep.subr.bf16.mxu0 0
        %589 = vmatpush1.bf16.msra.mxu0 %v542
        %590 = vmatprep.subr.bf16.mxu0 0
        %591 = vmatpush1.bf16.msra.mxu0 %v543
        %592 = vmatprep.mubr.bf16.mxu0 %v424
        %593 = vmatmul.mubr.bf16.gmra.mrb[0].mxu0 %v423
        %v594 = vpop.f32.mrb[0].mxu0
        %v595 = vadd.f32 %v462, %v594
        %v596 = vpop.f32.mrb[0].mxu0
        %v597 = vpop.f32.mrb[0].mxu0
        %v598 = vpop.f32.mrb[0].mxu0
        %599 = vdwg.mxu0
        %600 = vmax.xlane.f32.xlu0 %v595
        %v601 = vpop.xlane.xlu0 %600
        %v602 = vsub.f32 %v595, %v601
        %v603 = vmul.f32 %v602, 1.442695
        %v604 = vpow.pop %v603
        %605 = vadd.xlane.f32.xlu0 %v604
        %v606 = vpop.xlane.xlu0 %605
        %v607 = vlog2.pop %v606
        %v608 = vmul.f32 %v607, 0.6931472
        %v609 = vsub.f32 %v602, %v608
        %v610 = vpack.c.bf16 %v609, %v609
        %611 = vst [vmem:[%s268] sm:$0xf] %v610
        %p612 = scmp.lt.s32.totalorder %s20, 1
        %s613 = scalar_select %p612, %s20, 1
        %s614 = smul.addr %s613, 4
        %s615 = scalar_lea.vmem %s5, %s614
        // Predicated region
        $region53: #{classnet_forward.1} parent=39 // pred_check
          %p616 = pneg %p148
        $region54: #{classnet_forward.1} parent=39 // pred_check_branch
          %618 = sbr.rel (%p616) target = $region56
        $region55: #{classnet_forward.1} parent=39 // pred_region
          _
        $region56: #{classnet_forward.1} parent=39 // pred_fallthru
          _
      $region40: #{classnet_forward.1} parent=5 // pred_fallthru
        _
      %p619 = scmp.le.s32.totalorder 2, %s15
      // Predicated region
      $region57: #{classnet_forward.1} parent=5 // pred_check
        %p620 = pneg %p619
      $region58: #{classnet_forward.1} parent=5 // pred_check_branch
        %622 = sbr.rel (%p620) target = $region60
      $region59: #{classnet_forward.1} parent=5 // pred_region
        %s623 = ssub.s32 %s15, 2
        // Predicated region
        $region61: #{classnet_forward.1} parent=59 // pred_check
          %p624 = pneg %p154
        $region62: #{classnet_forward.1} parent=59 // pred_check_branch
          %626 = sbr.rel (%p624) target = $region64
        $region63: #{classnet_forward.1} parent=59 // pred_region
          %p627 = scmp.lt.s32.totalorder %s21, 1
          %s628 = scalar_select %p627, %s21, 1
          %s629 = smul.addr %s628, 4
          %s630 = scalar_lea.vmem %s5, %s629
        $region64: #{classnet_forward.1} parent=59 // pred_fallthru
          _
      $region60: #{classnet_forward.1} parent=5 // pred_fallthru
        _
    $region6: #{classnet_forward.1} parent=1 // loop_footer
      %s19 = sadd.s32 1, %s15
    $region7: #{classnet_forward.1} parent=1 // loop_footer_branch
      %14 = sbr.rel target = $region3
    $region8: #{classnet_forward.1} parent=1 // loop_exit
      _
    %631 = vsyncpa [#allocation3], 1
    %s632 = scalar_lea.sflag [#allocation3], 1
    %633 = vsyncpa %s632, 1
    %634 = vsyncpa [#allocation5], 1

</llo_original>
